<compile_context>
chip_gen: v5e
topology: v5e:2x2
jax: 0.10.0
libtpu: 0.0.40
codegen_flags: <defaults>
</compile_context>

<pallas_src>
import jax
import jax.numpy as jnp
from jax.experimental import pallas as pl
from jax.experimental.pallas import tpu as pltpu


def _ceil_to(x, m):
    return ((x + m - 1) // m) * m


def multi_linear_kernel(x_ref, w_ref, b_ref, o_ref, acc_ref):
    # x_ref: (1, tm, tk)   w_ref: (1, tk, tn)   b_ref: (1, 1, tn)
    # o_ref: (1, tm, tn)   acc_ref: (tm, tn) float32 scratch
    @pl.when(pl.program_id(3) == 0)
    def _():
        acc_ref[...] = jnp.zeros_like(acc_ref)

    acc_ref[...] += jnp.dot(x_ref[0], w_ref[0],
                            preferred_element_type=jnp.float32)

    @pl.when(pl.program_id(3) == pl.num_programs(3) - 1)
    def _():
        o_ref[0] = (acc_ref[...] + b_ref[0].astype(jnp.float32)).astype(o_ref.dtype)


def multi_linear(x, weight, bias=None, *, tm=256, tn=256, tk=512):
    """Pallas MultiLinear forward.

    x:      (batch, n_linears * in_features)   (anything reshapeable to
            (batch, n_linears, in_features), matching torch's .view)
    weight: (n_linears, in_features, out_features)
    bias:   (n_linears, 1, out_features) or None
    returns (batch, n_linears, out_features) float32
    """
    G, K, N = weight.shape
    batch = x.shape[0]
    dtype = weight.dtype

    # torch: x.view(batch, G, -1).permute(1, 0, 2)  ->  (G, batch, K)
    xg = x.reshape(batch, G, K).transpose(1, 0, 2).astype(dtype)

    # Clamp tile targets to the (8,128)-rounded problem dims.
    tm = min(tm, _ceil_to(batch, 8))
    tk = min(tk, _ceil_to(K, 128))
    tn = min(tn, _ceil_to(N, 128))

    Mp = _ceil_to(batch, tm)
    Kp = _ceil_to(K, tk)
    Np = _ceil_to(N, tn)

    xg = jnp.pad(xg, ((0, 0), (0, Mp - batch), (0, Kp - K)))
    wp = jnp.pad(weight, ((0, 0), (0, Kp - K), (0, Np - N)))
    if bias is None:
        bp = jnp.zeros((G, 1, Np), dtype)
    else:
        bp = jnp.pad(bias.reshape(G, 1, N).astype(dtype),
                     ((0, 0), (0, 0), (0, Np - N)))

    grid = (G, Mp // tm, Np // tn, Kp // tk)

    # VMEM budget: double-buffered in/out blocks + bias + f32 accumulator.
    itemsize = jnp.dtype(dtype).itemsize
    blk_bytes = 2 * itemsize * (tm * tk + tk * tn + tm * tn + tn) + 4 * tm * tn
    vmem_limit = int(min(max(2 * blk_bytes, 32 << 20), 64 << 20))

    out = pl.pallas_call(
        multi_linear_kernel,
        out_shape=jax.ShapeDtypeStruct((G, Mp, Np), jnp.float32),
        grid_spec=pltpu.PrefetchScalarGridSpec(
            num_scalar_prefetch=0,
            grid=grid,
            in_specs=[
                pl.BlockSpec((1, tm, tk), lambda g, i, j, k: (g, i, k)),  # x
                pl.BlockSpec((1, tk, tn), lambda g, i, j, k: (g, k, j)),  # W
                pl.BlockSpec((1, 1, tn), lambda g, i, j, k: (g, 0, j)),   # bias
            ],
            out_specs=pl.BlockSpec((1, tm, tn), lambda g, i, j, k: (g, i, j)),
            scratch_shapes=[pltpu.VMEM((tm, tn), jnp.float32)],
        ),
        compiler_params=pltpu.CompilerParams(
            dimension_semantics=("parallel", "parallel", "parallel", "arbitrary"),
            vmem_limit_bytes=vmem_limit,
        ),
    )(xg, wp, bp)

    out = out[:, :batch, :N]          # drop M/N padding
    return out.transpose(1, 0, 2)     # (batch, G, N), torch permute(1,0,2)


if __name__ == "__main__":
    key = jax.random.PRNGKey(0)
    k_w, k_b, k_x = jax.random.split(key, 3)

    batch, n_linears, in_features, out_features = 2, 4, 32, 32

    # xavier_normal_(gain=calculate_gain('relu')) on a (G, in, out) tensor:
    # torch's 3-D fan rule -> fan_in = in*out, fan_out = G*out.
    gain = 2.0 ** 0.5
    std = gain * (2.0 / (in_features * out_features
                         + n_linears * out_features)) ** 0.5
    weight = std * jax.random.normal(
        k_w, (n_linears, in_features, out_features), jnp.float32)
    # Module constructs bias as zeros; use random values here so the bias-add
    # path is actually exercised (bias is a learnable parameter).
    bias = 0.1 * jax.random.normal(
        k_b, (n_linears, 1, out_features), jnp.float32)

    x = jax.random.normal(k_x, (batch, n_linears * in_features), jnp.float32)

    out = multi_linear(x, weight, bias)
    out = jax.block_until_ready(out)

    # Pure-JAX reference of the module's forward.
    xg = x.reshape(batch, n_linears, in_features)
    ref = jnp.einsum("bgi,gio->bgo", xg, weight,
                     precision=jax.lax.Precision.HIGHEST) \
        + bias.reshape(1, n_linears, out_features)

    assert out.shape == (batch, n_linears, out_features)
    assert jnp.allclose(out, ref, atol=5e-3, rtol=5e-3), \
        float(jnp.max(jnp.abs(out - ref)))

    print("KERNEL_OK")
</pallas_src>

<mosaic_0001>
module attributes {stable_mosaic.version = 11 : i64} {
  func.func @multi_linear_kernel(%arg0: i32, %arg1: i32, %arg2: i32, %arg3: i32, %arg4: memref<1x8x128xf32, #tpu.memory_space<vmem>>, %arg5: memref<1x128x128xf32, #tpu.memory_space<vmem>>, %arg6: memref<1x1x128xf32, #tpu.memory_space<vmem>>, %arg7: memref<1x8x128xf32, #tpu.memory_space<vmem>>, %arg8: memref<8x128xf32, #tpu.memory_space<vmem>>) attributes {dimension_semantics = [#tpu.dimension_semantics<parallel>, #tpu.dimension_semantics<parallel>, #tpu.dimension_semantics<parallel>, #tpu.dimension_semantics<arbitrary>], iteration_bounds = array<i64: 4, 1, 1, 1>, scalar_prefetch = 0 : i64, scratch_operands = 1 : i64, tpu.core_type = #tpu.core_type<tc>, window_params = [{transform_indices = @transform_0, window_bounds = array<i64: 1, 8, 128>}, {transform_indices = @transform_1, window_bounds = array<i64: 1, 128, 128>}, {transform_indices = @transform_2, window_bounds = array<i64: 1, 1, 128>}, {transform_indices = @transform_3, window_bounds = array<i64: 1, 8, 128>}]} {
    %c0_i32 = arith.constant 0 : i32
    %0 = arith.cmpi eq, %arg3, %c0_i32 : i32
    %1 = arith.extui %0 : i1 to i32
    %c0_i32_0 = arith.constant 0 : i32
    %2 = arith.cmpi ne, %1, %c0_i32_0 : i32
    scf.if %2 {
      %cst_12 = arith.constant 0.000000e+00 : f32
      %14 = vector.broadcast %cst_12 : f32 to vector<8x128xf32>
      %c0_13 = arith.constant 0 : index
      %c0_14 = arith.constant 0 : index
      %15 = vector.load %arg8[%c0_13, %c0_14] : memref<8x128xf32, #tpu.memory_space<vmem>>, vector<8x128xf32>
      tpu.vector_store %arg8[%c0_13, %c0_14], %14 {strides = array<i32>} : memref<8x128xf32, #tpu.memory_space<vmem>>, vector<8x128xf32>,
    } else {
    }
    %c0 = arith.constant 0 : index
    %c0_1 = arith.constant 0 : index
    %3 = vector.load %arg8[%c0, %c0_1] : memref<8x128xf32, #tpu.memory_space<vmem>>, vector<8x128xf32>
    %c0_2 = arith.constant 0 : index
    %c0_3 = arith.constant 0 : index
    %c0_4 = arith.constant 0 : index
    %4 = vector.load %arg4[%c0_2, %c0_3, %c0_4] : memref<1x8x128xf32, #tpu.memory_space<vmem>>, vector<1x8x128xf32>
    %5 = vector.shape_cast %4 : vector<1x8x128xf32> to vector<8x128xf32>
    %c0_5 = arith.constant 0 : index
    %c0_6 = arith.constant 0 : index
    %c0_7 = arith.constant 0 : index
    %6 = vector.load %arg5[%c0_5, %c0_6, %c0_7] : memref<1x128x128xf32, #tpu.memory_space<vmem>>, vector<1x128x128xf32>
    %7 = vector.shape_cast %6 : vector<1x128x128xf32> to vector<128x128xf32>
    %cst = arith.constant dense<0.000000e+00> : vector<8x128xf32>
    %8 = tpu.matmul %5, %7, %cst {dimension_numbers = #tpu.dot_dimension_numbers<[1], [0], [0], [1], [0, 0, 1, 1], [], []>} : vector<8x128xf32>, vector<128x128xf32>, vector<8x128xf32> -> vector<8x128xf32>
    %9 = arith.addf %3, %8 : vector<8x128xf32>
    %c0_8 = arith.constant 0 : index
    %c0_9 = arith.constant 0 : index
    %10 = vector.load %arg8[%c0_8, %c0_9] : memref<8x128xf32, #tpu.memory_space<vmem>>, vector<8x128xf32>
    tpu.vector_store %arg8[%c0_8, %c0_9], %9 {strides = array<i32>} : memref<8x128xf32, #tpu.memory_space<vmem>>, vector<8x128xf32>,
    %c0_i32_10 = arith.constant 0 : i32
    %11 = arith.cmpi eq, %arg3, %c0_i32_10 : i32
    %12 = arith.extui %11 : i1 to i32
    %c0_i32_11 = arith.constant 0 : i32
    %13 = arith.cmpi ne, %12, %c0_i32_11 : i32
    scf.if %13 {
      %c0_12 = arith.constant 0 : index
      %c0_13 = arith.constant 0 : index
      %14 = vector.load %arg8[%c0_12, %c0_13] : memref<8x128xf32, #tpu.memory_space<vmem>>, vector<8x128xf32>
      %c0_14 = arith.constant 0 : index
      %c0_15 = arith.constant 0 : index
      %c0_16 = arith.constant 0 : index
      %15 = vector.load %arg6[%c0_14, %c0_15, %c0_16] : memref<1x1x128xf32, #tpu.memory_space<vmem>>, vector<1x1x128xf32>
      %16 = vector.shape_cast %15 : vector<1x1x128xf32> to vector<1x128xf32>
      %17 = vector.broadcast %16 : vector<1x128xf32> to vector<8x128xf32>
      %18 = arith.addf %14, %17 : vector<8x128xf32>
      %c0_17 = arith.constant 0 : index
      %c0_18 = arith.constant 0 : index
      %c0_19 = arith.constant 0 : index
      %19 = vector.load %arg7[%c0_17, %c0_18, %c0_19] : memref<1x8x128xf32, #tpu.memory_space<vmem>>, vector<1x8x128xf32>
      %20 = vector.shape_cast %19 : vector<1x8x128xf32> to vector<8x128xf32>
      %21 = vector.shape_cast %18 : vector<8x128xf32> to vector<1x8x128xf32>
      tpu.vector_store %arg7[%c0_17, %c0_18, %c0_19], %21 {strides = array<i32>} : memref<1x8x128xf32, #tpu.memory_space<vmem>>, vector<1x8x128xf32>,
    } else {
    }
    return
  }
  func.func @transform_0(%arg0: i32, %arg1: i32, %arg2: i32, %arg3: i32) -> (i32, i32, i32) {
    %c0_i32 = arith.constant 0 : i32
    return %arg0, %arg1, %arg3 : i32, i32, i32
  }
  func.func @transform_1(%arg0: i32, %arg1: i32, %arg2: i32, %arg3: i32) -> (i32, i32, i32) {
    %c0_i32 = arith.constant 0 : i32
    return %arg0, %arg3, %arg2 : i32, i32, i32
  }
  func.func @transform_2(%arg0: i32, %arg1: i32, %arg2: i32, %arg3: i32) -> (i32, i32, i32) {
    %c0_i32 = arith.constant 0 : i32
    %c0_i32_0 = arith.constant 0 : i32
    return %arg0, %c0_i32, %arg2 : i32, i32, i32
  }
  func.func @transform_3(%arg0: i32, %arg1: i32, %arg2: i32, %arg3: i32) -> (i32, i32, i32) {
    %c0_i32 = arith.constant 0 : i32
    return %arg0, %arg1, %arg2 : i32, i32, i32
  }
}

</mosaic_0001>

<llo_original>
// kernel: tpu_custom_call.1
$region0: #{tpu_custom_call.1}
  #allocation0 [shape = 'u32[]', space=smem, size = 0x4, offset = 0x4, fixed_abs, tag = 'smem constant byte address 0x4 - core index']
  #allocation1 [shape = 'u32[72,128]{1,0:T(1,128)}', space=vmem, size = 0x9000, scoped, tag = 'internal scratch']
  #allocation2 [shape = 'f32[8,128]{1,0:T(8,128)}', space=vmem, size = 0x1000, scoped, tag = 'scratch operand']
  %s0 = inlined_call_operand.hbm [shape: f32[4,8,128], index: 0, kind: input, shape index: {}]
  %s1 = inlined_call_operand.hbm [shape: f32[4,128,128], index: 1, kind: input, shape index: {}]
  %s2 = inlined_call_operand.hbm [shape: f32[4,1,128], index: 2, kind: input, shape index: {}]
  %s3 = inlined_call_operand.hbm [shape: f32[4,8,128], index: 3, kind: output, shape index: {}]
  %s4 = sld [smem:[#allocation0]]
  $region65: #{tpu_custom_call.1} parent=0
    _
  %s6 = ssub.s32 1, %s4
  %s7 = scalar_select 0, %s6, %s4
  $region1: #{tpu_custom_call.1} parent=0
    #allocation3 [shape = 'u8[8192]{0}', space=vmem, size = 0x2000, scoped, tag = 'input window, operand 0']
    #allocation4 [shape = 's32[2]{0}', space=sflag, size = 0x8, scoped, tag = 'scoped memory for tpu_custom_call.1']
    #allocation5 [shape = 's32[2]{0}', space=sflag, size = 0x8, scoped, tag = 'scoped memory for tpu_custom_call.1']
    #allocation6 [shape = 'u8[131072]{0}', space=vmem, size = 0x20000, scoped, tag = 'input window, operand 1']
    #allocation7 [shape = 's32[2]{0}', space=sflag, size = 0x8, scoped, tag = 'scoped memory for tpu_custom_call.1']
    #allocation8 [shape = 'u8[1024]{0}', space=vmem, size = 0x400, scoped, tag = 'input window, operand 2']
    #allocation9 [shape = 'u8[8192]{0}', space=vmem, size = 0x2000, scoped, tag = 'output window, operand 0']
    %8 = vsyncpa [#allocation4], 0
    %s9 = scalar_lea.sflag [#allocation4], 1
    %10 = vsyncpa %s9, 0
    %11 = vsyncpa [#allocation7], 0
    %s12 = scalar_lea.sflag [#allocation7], 1
    %13 = vsyncpa %s12, 0
    %14 = vsyncpa [#allocation5], 0
    %s15 = scalar_lea.sflag [#allocation5], 1
    %16 = vsyncpa %s15, 0
    loop: start=0, step=1, limit=6
    $region2: #{tpu_custom_call.1} parent=1 // loop_pre_header
      _
    $region3: #{tpu_custom_call.1} parent=1 // loop_header
      %s18 = sphi 0, %s22
      %p19 = scmp.ge.s32.totalorder %s18, 6
      %s25 = sphi 0, %s51
      %s26 = sphi 0, %s47
      %s27 = sphi 0, %s43
      %s28 = sphi 0, %s39
      %s29 = sphi 0, %s25
      %s30 = sphi 0, %s26
      %s31 = sphi 0, %s27
      %s32 = sphi 0, %s28
      %s33 = sphi 0, %s29
      %s34 = sphi 0, %s30
      %s35 = sphi 0, %s31
      %s36 = sphi 0, %s32
      %s58 = sphi 0, %s60
      %s61 = sphi 0, %s58
      %s62 = sphi 0, %s61
      %s78 = sphi 0, %s62
      %s88 = sphi 0, %s90
      %s91 = sphi 0, %s88
      %s92 = sphi 0, %s91
      %s108 = sphi 0, %s92
      %s116 = sphi 0, %s118
      %s119 = sphi 0, %s116
      %s120 = sphi 0, %s119
      %s136 = sphi 0, %s120
      %s146 = sphi 0, %s148
      %s149 = sphi 0, %s146
      %s150 = sphi 0, %s149
      %s166 = sphi 0, %s150
    $region4: #{tpu_custom_call.1} parent=1 // loop_header_branch
      %21 = sbr.rel (%p19) target = $region8
    $region5: #{tpu_custom_call.1} parent=1 // loop_body
      %s23 = ssub.s32 %s18, 1
      %s24 = ssub.s32 %s18, 2
      %s37 = sadd.s32 1, %s28
      %p38 = scmp.ge.s32.totalorder %s37, 1
      %s39 = scalar_select %p38, 0, %s37
      %s40 = sadd.s32 1, %s27
      %s41 = scalar_select %p38, %s40, %s27
      %p42 = scmp.ge.s32.totalorder %s41, 1
      %s43 = scalar_select %p42, 0, %s41
      %s44 = sadd.s32 1, %s26
      %s45 = scalar_select %p42, %s44, %s26
      %p46 = scmp.ge.s32.totalorder %s45, 1
      %s47 = scalar_select %p46, 0, %s45
      %s48 = sadd.s32 1, %s25
      %s49 = scalar_select %p46, %s48, %s25
      %p50 = scmp.ge.s32.totalorder %s49, 4
      %s51 = scalar_select %p50, 0, %s49
      %s52 = ssub.s32 %s25, %s51
      %s53 = ssub.s32 %s26, %s47
      %s54 = sor.u32 %s52, %s53
      %s55 = ssub.s32 %s28, %s39
      %s56 = sor.u32 %s54, %s55
      %p57 = scmp.eq.s32.totalorder %s56, 0
      %s59 = sadd.s32 %s58, 1
      %s60 = scalar_select %p57, %s58, %s59
      %p63 = pneg %p57
      %p64 = scmp.eq.s32.totalorder %s18, 3
      %p65 = por %p63, %p64
      %p66 = scmp.ne.s32.totalorder %s58, %s61
      %p67 = scmp.eq.s32.totalorder %s18, 0
      %p68 = por %p66, %p67
      %p69 = scmp.ne.s32.totalorder %s58, %s61
      %p70 = scmp.eq.s32.totalorder %s23, 3
      %p71 = por %p69, %p70
      %p72 = scmp.ne.s32.totalorder %s61, %s62
      %p73 = scmp.eq.s32.totalorder %s23, 0
      %p74 = por %p72, %p73
      %p75 = scmp.ne.s32.totalorder %s61, %s62
      %p76 = scmp.eq.s32.totalorder %s24, 3
      %p77 = por %p75, %p76
      %p79 = scmp.ne.s32.totalorder %s62, %s78
      %p80 = scmp.eq.s32.totalorder %s24, 0
      %p81 = por %p79, %p80
      %s82 = ssub.s32 %s25, %s51
      %s83 = ssub.s32 %s28, %s39
      %s84 = sor.u32 %s82, %s83
      %s85 = ssub.s32 %s27, %s43
      %s86 = sor.u32 %s84, %s85
      %p87 = scmp.eq.s32.totalorder %s86, 0
      %s89 = sadd.s32 %s88, 1
      %s90 = scalar_select %p87, %s88, %s89
      %p93 = pneg %p87
      %p94 = scmp.eq.s32.totalorder %s18, 3
      %p95 = por %p93, %p94
      %p96 = scmp.ne.s32.totalorder %s88, %s91
      %p97 = scmp.eq.s32.totalorder %s18, 0
      %p98 = por %p96, %p97
      %p99 = scmp.ne.s32.totalorder %s88, %s91
      %p100 = scmp.eq.s32.totalorder %s23, 3
      %p101 = por %p99, %p100
      %p102 = scmp.ne.s32.totalorder %s91, %s92
      %p103 = scmp.eq.s32.totalorder %s23, 0
      %p104 = por %p102, %p103
      %p105 = scmp.ne.s32.totalorder %s91, %s92
      %p106 = scmp.eq.s32.totalorder %s24, 3
      %p107 = por %p105, %p106
      %p109 = scmp.ne.s32.totalorder %s92, %s108
      %p110 = scmp.eq.s32.totalorder %s24, 0
      %p111 = por %p109, %p110
      %s112 = ssub.s32 %s25, %s51
      %s113 = ssub.s32 %s27, %s43
      %s114 = sor.u32 %s112, %s113
      %p115 = scmp.eq.s32.totalorder %s114, 0
      %s117 = sadd.s32 %s116, 1
      %s118 = scalar_select %p115, %s116, %s117
      %p121 = pneg %p115
      %p122 = scmp.eq.s32.totalorder %s18, 3
      %p123 = por %p121, %p122
      %p124 = scmp.ne.s32.totalorder %s116, %s119
      %p125 = scmp.eq.s32.totalorder %s18, 0
      %p126 = por %p124, %p125
      %p127 = scmp.ne.s32.totalorder %s116, %s119
      %p128 = scmp.eq.s32.totalorder %s23, 3
      %p129 = por %p127, %p128
      %p130 = scmp.ne.s32.totalorder %s119, %s120
      %p131 = scmp.eq.s32.totalorder %s23, 0
      %p132 = por %p130, %p131
      %p133 = scmp.ne.s32.totalorder %s119, %s120
      %p134 = scmp.eq.s32.totalorder %s24, 3
      %p135 = por %p133, %p134
      %p137 = scmp.ne.s32.totalorder %s120, %s136
      %p138 = scmp.eq.s32.totalorder %s24, 0
      %p139 = por %p137, %p138
      %s140 = ssub.s32 %s25, %s51
      %s141 = ssub.s32 %s26, %s47
      %s142 = sor.u32 %s140, %s141
      %s143 = ssub.s32 %s27, %s43
      %s144 = sor.u32 %s142, %s143
      %p145 = scmp.eq.s32.totalorder %s144, 0
      %s147 = sadd.s32 %s146, 1
      %s148 = scalar_select %p145, %s146, %s147
      %p151 = pneg %p145
      %p152 = scmp.eq.s32.totalorder %s18, 3
      %p153 = por %p151, %p152
      %p154 = scmp.ne.s32.totalorder %s146, %s149
      %p155 = scmp.eq.s32.totalorder %s18, 0
      %p156 = por %p154, %p155
      %p157 = scmp.ne.s32.totalorder %s146, %s149
      %p158 = scmp.eq.s32.totalorder %s23, 3
      %p159 = por %p157, %p158
      %p160 = scmp.ne.s32.totalorder %s149, %s150
      %p161 = scmp.eq.s32.totalorder %s23, 0
      %p162 = por %p160, %p161
      %p163 = scmp.ne.s32.totalorder %s149, %s150
      %p164 = scmp.eq.s32.totalorder %s24, 3
      %p165 = por %p163, %p164
      %p167 = scmp.ne.s32.totalorder %s150, %s166
      %p168 = scmp.eq.s32.totalorder %s24, 0
      %p169 = por %p167, %p168
      %p170 = scmp.le.s32.totalorder 1, %s18
      %p171 = scmp.lt.s32.totalorder %s18, 5
      %p172 = pnand %p170, %p171
      %p173 = pneg %p172
      // Predicated region
      $region9: #{tpu_custom_call.1} parent=5 // pred_check
        _
      $region10: #{tpu_custom_call.1} parent=5 // pred_check_branch
        %175 = sbr.rel (%p172) target = $region12
      $region11: #{tpu_custom_call.1} parent=5 // pred_region
        %s176 = ssub.s32 %s18, 1
      $region12: #{tpu_custom_call.1} parent=5 // pred_fallthru
        _
      %p177 = scmp.lt.s32.totalorder %s18, 4
      // Predicated region
      $region13: #{tpu_custom_call.1} parent=5 // pred_check
        %p178 = pneg %p177
      $region14: #{tpu_custom_call.1} parent=5 // pred_check_branch
        %180 = sbr.rel (%p178) target = $region16
      $region15: #{tpu_custom_call.1} parent=5 // pred_region
        // Predicated region
        $region17: #{tpu_custom_call.1} parent=15 // pred_check
          %p181 = pneg %p68
        $region18: #{tpu_custom_call.1} parent=15 // pred_check_branch
          %183 = sbr.rel (%p181) target = $region20
        $region19: #{tpu_custom_call.1} parent=15 // pred_region
          %s184 = sand.u32 %s58, 1
          %s185 = scalar_lea.sflag [#allocation4], %s184
          %s186 = sand.u32 %s58, 1
          %s187 = smul.addr %s186, 8
          %s188 = scalar_lea.vmem [#allocation3], %s187
          %190 = vsyncadd %s185, 0
          %s191 = sadd.s32 %s28, %s26
          %s192 = sadd.s32 %s191, %s25
          %s193 = smul.addr %s192, 8
          %s194 = scalar_lea.hbm %s0, %s193
          %s196 = sshll.u32 %s194, 4
          %s197 = int_to_ptr.hbm [resolvable:$true] %s196
          %s198 = sshll.u32 %s188, 4
          %s199 = int_to_ptr.vmem [resolvable:$true] %s198
          %201 = dma.hbm_to_vmem [thread:$0]  %s197, 128, %s199, %s185
        $region20: #{tpu_custom_call.1} parent=15 // pred_fallthru
          _
        // Predicated region
        $region21: #{tpu_custom_call.1} parent=15 // pred_check
          %p202 = pneg %p98
        $region22: #{tpu_custom_call.1} parent=15 // pred_check_branch
          %204 = sbr.rel (%p202) target = $region24
        $region23: #{tpu_custom_call.1} parent=15 // pred_region
          %s205 = sand.u32 %s18, 1
          %s206 = scalar_lea.sflag [#allocation7], %s205
          %s207 = sand.u32 %s88, 1
          %s208 = smul.addr %s207, 128
          %s209 = scalar_lea.vmem [#allocation6], %s208
          %s210 = smul.u32 16, %s28
          %212 = vsyncadd %s206, 0
          %s213 = sadd.s32 %s27, %s210
          %s214 = smul.addr %s25, 16
          %s215 = sadd.s32 %s213, %s214
          %s216 = smul.addr %s215, 8
          %s217 = scalar_lea.hbm %s1, %s216
          %s218 = sshll.u32 %s217, 4
          %s219 = int_to_ptr.hbm [resolvable:$true] %s218
          %s220 = sshll.u32 %s209, 4
          %s221 = int_to_ptr.vmem [resolvable:$true] %s220
          %226 = dma.hbm_to_vmem [thread:$0]  %s219, 2048, %s221, %s206, 128, 128, 8
        $region24: #{tpu_custom_call.1} parent=15 // pred_fallthru
          _
        // Predicated region
        $region25: #{tpu_custom_call.1} parent=15 // pred_check
          %p227 = pneg %p126
        $region26: #{tpu_custom_call.1} parent=15 // pred_check_branch
          %229 = sbr.rel (%p227) target = $region28
        $region27: #{tpu_custom_call.1} parent=15 // pred_region
          %s230 = sand.u32 %s18, 1
          %s231 = scalar_lea.sflag [#allocation7], %s230
          %s232 = sand.u32 %s116, 1
          %s233 = scalar_lea.vmem [#allocation8], %s232
          %235 = vsyncadd %s231, 0
          %s236 = sadd.s32 %s27, %s25
          %s237 = scalar_lea.hbm %s2, %s236
          %s239 = sshll.u32 %s237, 4
          %s240 = int_to_ptr.hbm [resolvable:$true] %s239
          %s241 = sshll.u32 %s233, 4
          %s242 = int_to_ptr.vmem [resolvable:$true] %s241
          %244 = dma.hbm_to_vmem [thread:$0]  %s240, 16, %s242, %s231
        $region28: #{tpu_custom_call.1} parent=15 // pred_fallthru
          _
      $region16: #{tpu_custom_call.1} parent=5 // pred_fallthru
        _
      %p245 = scmp.le.s32.totalorder 1, %s18
      %p246 = scmp.lt.s32.totalorder %s18, 5
      %p247 = pnand %p245, %p246
      %p248 = pneg %p247
      // Predicated region
      $region29: #{tpu_custom_call.1} parent=5 // pred_check
        _
      $region30: #{tpu_custom_call.1} parent=5 // pred_check_branch
        %250 = sbr.rel (%p247) target = $region32
      $region31: #{tpu_custom_call.1} parent=5 // pred_region
        %s251 = ssub.s32 %s18, 1
        %s252 = sand.u32 %s61, 1
        %s253 = scalar_lea.sflag [#allocation4], %s252
        %s254 = sand.u32 %s61, 1
        %s255 = smul.addr %s254, 8
        %s256 = scalar_lea.vmem [#allocation3], %s255
        // Predicated region
        $region33: #{tpu_custom_call.1} parent=31 // pred_check
          %p257 = pneg %p74
        $region34: #{tpu_custom_call.1} parent=31 // pred_check_branch
          %259 = sbr.rel (%p257) target = $region36
        $region35: #{tpu_custom_call.1} parent=31 // pred_region
          %261 = dma.done %s253, 128
        $region36: #{tpu_custom_call.1} parent=31 // pred_fallthru
          _
        %s262 = sand.u32 %s23, 1
        %s263 = scalar_lea.sflag [#allocation7], %s262
        %s264 = sand.u32 %s91, 1
        %s265 = smul.addr %s264, 128
        %s266 = scalar_lea.vmem [#allocation6], %s265
        // Predicated region
        $region37: #{tpu_custom_call.1} parent=31 // pred_check
          %p267 = pneg %p104
        $region38: #{tpu_custom_call.1} parent=31 // pred_check_branch
          %269 = sbr.rel (%p267) target = $region40
        $region39: #{tpu_custom_call.1} parent=31 // pred_region
          %271 = dma.done %s263, 2048
        $region40: #{tpu_custom_call.1} parent=31 // pred_fallthru
          _
        %s272 = sand.u32 %s23, 1
        %s273 = scalar_lea.sflag [#allocation7], %s272
        %s274 = sand.u32 %s119, 1
        %s275 = scalar_lea.vmem [#allocation8], %s274
        // Predicated region
        $region41: #{tpu_custom_call.1} parent=31 // pred_check
          %p276 = pneg %p132
        $region42: #{tpu_custom_call.1} parent=31 // pred_check_branch
          %278 = sbr.rel (%p276) target = $region44
        $region43: #{tpu_custom_call.1} parent=31 // pred_region
          %280 = dma.done %s273, 16
        $region44: #{tpu_custom_call.1} parent=31 // pred_fallthru
          _
        %s281 = sand.u32 %s61, 1
        %s282 = scalar_lea.sflag [#allocation4], %s281
        %s283 = sand.u32 %s61, 1
        %s284 = smul.addr %s283, 8
        %s285 = scalar_lea.vmem [#allocation3], %s284
        %p286 = pneg %p74
        %p287 = pneg %p71
        %s288 = sand.u32 %s23, 1
        %s289 = scalar_lea.sflag [#allocation7], %s288
        %s290 = sand.u32 %s91, 1
        %s291 = smul.addr %s290, 128
        %s292 = scalar_lea.vmem [#allocation6], %s291
        %p293 = pneg %p104
        %p294 = pneg %p101
        %s295 = sand.u32 %s23, 1
        %s296 = scalar_lea.sflag [#allocation7], %s295
        %s297 = sand.u32 %s119, 1
        %s298 = scalar_lea.vmem [#allocation8], %s297
        %p299 = pneg %p132
        %p300 = pneg %p129
        %p301 = pneg %p162
        %p302 = pneg %p159
        %s303 = sand.u32 %s149, 1
        %s304 = scalar_lea.sflag [#allocation5], %s303
        %s305 = sand.u32 %s149, 1
        %s306 = smul.addr %s305, 8
        %s307 = scalar_lea.vmem [#allocation9], %s306
        %s308 = smul.u32 16, %s32
        %p309 = scmp.eq.s32.totalorder %s32, 0
        // Predicated region
        $region45: #{tpu_custom_call.1} parent=31 // pred_check
          %p310 = pneg %p309
        $region46: #{tpu_custom_call.1} parent=31 // pred_check_branch
          %312 = sbr.rel (%p310) target = $region48
        $region47: #{tpu_custom_call.1} parent=31 // pred_region
          %313 = vst [vmem:[#allocation2] sm:$0xff] 0.0
        $region48: #{tpu_custom_call.1} parent=31 // pred_fallthru
          _
        %v314 = vld [vmem:[#allocation2] sm:$0xff]
        %v315 = vld [vmem:[%s256] sm:$0xff]
        %v316 = vld [vmem:[%s266] sm:$0xff]
        %v317 = vld [vmem:[%s266 + $0x8] sm:$0xff]
        %v318 = vld [vmem:[%s266 + $0x10] sm:$0xff]
        %v319 = vld [vmem:[%s266 + $0x18] sm:$0xff]
        %v320 = vld [vmem:[%s266 + $0x20] sm:$0xff]
        %v321 = vld [vmem:[%s266 + $0x28] sm:$0xff]
        %v322 = vld [vmem:[%s266 + $0x30] sm:$0xff]
        %v323 = vld [vmem:[%s266 + $0x38] sm:$0xff]
        %v324 = vld [vmem:[%s266 + $0x40] sm:$0xff]
        %v325 = vld [vmem:[%s266 + $0x48] sm:$0xff]
        %v326 = vld [vmem:[%s266 + $0x50] sm:$0xff]
        %v327 = vld [vmem:[%s266 + $0x58] sm:$0xff]
        %v328 = vld [vmem:[%s266 + $0x60] sm:$0xff]
        %v329 = vld [vmem:[%s266 + $0x68] sm:$0xff]
        %v330 = vld [vmem:[%s266 + $0x70] sm:$0xff]
        %v331 = vld [vmem:[%s266 + $0x78] sm:$0xff]
        %332 = vmatpush.msra.mxu0 %v331
        %333 = vmatpush.msra.mxu0 %v330
        %334 = vmatpush.msra.mxu0 %v329
        %335 = vmatpush.msra.mxu0 %v328
        %336 = vmatpush.msra.mxu0 %v327
        %337 = vmatpush.msra.mxu0 %v326
        %338 = vmatpush.msra.mxu0 %v325
        %339 = vmatpush.msra.mxu0 %v324
        %340 = vmatpush.msra.mxu0 %v323
        %341 = vmatpush.msra.mxu0 %v322
        %342 = vmatpush.msra.mxu0 %v321
        %343 = vmatpush.msra.mxu0 %v320
        %344 = vmatpush.msra.mxu0 %v319
        %345 = vmatpush.msra.mxu0 %v318
        %346 = vmatpush.msra.mxu0 %v317
        %347 = vmatpush.msra.mxu0 %v316
        %348 = vmatmul.f32.gmra.mxu0 %v315
        %v349 = vpop.f32.mrf.mxu0
        %v350 = vadd.f32 0.0, %v349
        %351 = vdwg.mxu0
        %v352 = vadd.f32 %v314, %v350
        %353 = vst [vmem:[#allocation2] sm:$0xff] %v352
        // Predicated region
        $region49: #{tpu_custom_call.1} parent=31 // pred_check
          %p354 = pneg %p309
        $region50: #{tpu_custom_call.1} parent=31 // pred_check_branch
          %356 = sbr.rel (%p354) target = $region52
        $region51: #{tpu_custom_call.1} parent=31 // pred_region
          %v357 = vld [vmem:[#allocation2] sm:$0xff]
          %v358 = vld [vmem:[%s275] sm:$0x1]
          %v360 = vperm.slane %v358, 0
          %v362 = vadd.f32 %v357, %v360
          %363 = vst [vmem:[%s307] sm:$0xff] %v362
        $region52: #{tpu_custom_call.1} parent=31 // pred_fallthru
          _
        %s364 = sand.u32 %s149, 1
        %s365 = scalar_lea.sflag [#allocation5], %s364
        %s366 = sand.u32 %s149, 1
        %s367 = smul.addr %s366, 8
        %s368 = scalar_lea.vmem [#allocation9], %s367
        // Predicated region
        $region53: #{tpu_custom_call.1} parent=31 // pred_check
          %p369 = pneg %p159
        $region54: #{tpu_custom_call.1} parent=31 // pred_check_branch
          %371 = sbr.rel (%p369) target = $region56
        $region55: #{tpu_custom_call.1} parent=31 // pred_region
          %373 = vsyncadd %s365, 0
          %s374 = sadd.s32 %s31, %s30
          %s375 = sadd.s32 %s374, %s29
          %s376 = smul.addr %s375, 8
          %s377 = scalar_lea.hbm %s3, %s376
          %s379 = sshll.u32 %s368, 4
          %s380 = int_to_ptr.vmem [resolvable:$true] %s379
          %s381 = sshll.u32 %s377, 4
          %s382 = int_to_ptr.hbm [resolvable:$true] %s381
          %384 = dma.vmem_to_hbm [thread:$0]  %s380, 128, %s382, %s365
        $region56: #{tpu_custom_call.1} parent=31 // pred_fallthru
          _
      $region32: #{tpu_custom_call.1} parent=5 // pred_fallthru
        _
      %p385 = scmp.le.s32.totalorder 2, %s18
      // Predicated region
      $region57: #{tpu_custom_call.1} parent=5 // pred_check
        %p386 = pneg %p385
      $region58: #{tpu_custom_call.1} parent=5 // pred_check_branch
        %388 = sbr.rel (%p386) target = $region60
      $region59: #{tpu_custom_call.1} parent=5 // pred_region
        %s389 = ssub.s32 %s18, 2
        // Predicated region
        $region61: #{tpu_custom_call.1} parent=59 // pred_check
          %p390 = pneg %p165
        $region62: #{tpu_custom_call.1} parent=59 // pred_check_branch
          %392 = sbr.rel (%p390) target = $region64
        $region63: #{tpu_custom_call.1} parent=59 // pred_region
          %s393 = sand.u32 %s150, 1
          %s394 = scalar_lea.sflag [#allocation5], %s393
          %s395 = sand.u32 %s150, 1
          %s396 = smul.addr %s395, 8
          %s397 = scalar_lea.vmem [#allocation9], %s396
          %399 = dma.done %s394, 128
        $region64: #{tpu_custom_call.1} parent=59 // pred_fallthru
          _
      $region60: #{tpu_custom_call.1} parent=5 // pred_fallthru
        _
    $region6: #{tpu_custom_call.1} parent=1 // loop_footer
      %s22 = sadd.s32 1, %s18
    $region7: #{tpu_custom_call.1} parent=1 // loop_footer_branch
      %17 = sbr.rel target = $region3
    $region8: #{tpu_custom_call.1} parent=1 // loop_exit
      _
    %400 = vsyncpa [#allocation4], 1
    %s401 = scalar_lea.sflag [#allocation4], 1
    %402 = vsyncpa %s401, 1
    %403 = vsyncpa [#allocation7], 1
    %s404 = scalar_lea.sflag [#allocation7], 1
    %405 = vsyncpa %s404, 1
    %406 = vsyncpa [#allocation5], 1
    %s407 = scalar_lea.sflag [#allocation5], 1
    %408 = vsyncpa %s407, 1

</llo_original>
